<compile_context>
chip_gen: v5e
topology: v5e:2x2
jax: 0.10.0
libtpu: 0.0.40
codegen_flags: <defaults>
</compile_context>

<pallas_src>
import functools

import jax
import jax.numpy as jnp
import numpy as np
from jax.experimental import pallas as pl
from jax.experimental.pallas import tpu as pltpu


def _perturb_kernel(x_ref, noise_ref, w_ref, shift_ref, o_ref, *, nmasks, use_act):
    """One (pixel-tile, batch) grid step; pixels stay on the lane axis.

    x_ref     : (1, C, TP)    input slab (one batch element)
    noise_ref : (M, C, TP)    level-scaled noise masks
    w_ref     : (M, OUT, C)   per-mask dense grouped-1x1-conv weight, BN scale folded
    shift_ref : (OUT, 1)      conv bias + inference-BN shift (f32)
    o_ref     : (1, OUT, TP)
    """
    x = x_ref[0]                                           # (C, TP)
    acc = None
    for m in range(nmasks):                                # tiny static unroll (M ~ 4)
        y = x + noise_ref[m]                               # perturbation (level pre-folded)
        if use_act:
            y = jnp.maximum(y, 0.0)                        # relu before the 1x1 conv
        z = jnp.dot(w_ref[m], y, preferred_element_type=jnp.float32)   # (OUT, TP)
        acc = z if acc is None else acc + z
    z = acc + shift_ref[...]                               # conv bias + BN shift
    z = jnp.maximum(z, 0.0)                                # act='relu'
    o_ref[0] = z.astype(o_ref.dtype)


def _pick_tile_pixels(hw, n_batch, c, m, out_ch, itemsize,
                      vmem_budget=8 * 1024 * 1024, cap=16384):
    """Largest pixel tile that fits a conservative double-buffered VMEM budget.

    Tile is either the full HW or a 128-multiple divisor of HW (the (8,128)
    rule). Also guarantees >=2 total grid steps when that is free, so both
    v7x TensorCores get work (on v5e/v6e one extra ~0.35us step is noise).
    """
    pad8 = lambda v: ((v + 7) // 8) * 8
    # per-pixel double-buffered VMEM cost of the x / noise / out streams
    bytes_per_px = (pad8(c) + m * pad8(c) + pad8(out_ch)) * itemsize * 2
    cap = min(cap, max(256, vmem_budget // bytes_per_px))
    cap = max(128, (cap // 128) * 128)
    if hw <= cap:
        tp = hw
    else:
        tp = hw  # fallback: single full tile (only hit for odd HW with no 128-divisor)
        t = cap
        while t >= 128:
            if hw % t == 0:
                tp = t
                break
            t -= 128
    if n_batch == 1 and tp == hw and hw % 256 == 0:
        tp = hw // 2                                        # >=2 parallel steps for v7x
    return tp


def prepare_perturb_params(noise, level, conv_w, conv_b, bn_gamma, bn_beta,
                           bn_mean, bn_var, *, in_channels, out_channels,
                           nmasks, eps=1e-5, io_dtype=jnp.float32):
    """One-time parameter prep (hoisted out of the hot path).

    Returns (noise_mc, w_mc, shift):
      noise_mc : (M, C, HW)   noise * level, m-major, pixels last
      w_mc     : (M, OUT, C)  dense grouped-1x1-conv weight with BN scale folded
      shift    : (OUT, 1)     (conv_bias - bn_mean) * scale + bn_beta   (f32)
    """
    C, M, OUT = in_channels, nmasks, out_channels
    CM = C * M
    _, c_noise, m_noise, H, W = noise.shape
    assert m_noise == M
    HW = H * W
    f32 = jnp.float32
    groups = C if M != 1 else 1            # mirrors the PyTorch module's logic
    in_per_group = CM // groups
    out_per_group = OUT // groups

    # noise: (1, C_noise, M, H, W) -> (M, C, HW), `level` folded in.
    nz = jnp.broadcast_to(noise[0].astype(f32), (C, M, H, W)) * level
    noise_mc = jnp.transpose(nz, (1, 0, 2, 3)).reshape(M, C, HW)

    # grouped 1x1 conv weight -> dense (OUT, C*M) (input index k = c*M + m,
    # matching y.view(N, C*M, H, W)), then reorder to per-mask (M, OUT, C)
    # and fold the inference-BN scale into it.
    w2 = conv_w.reshape(OUT, in_per_group).astype(f32)
    o_idx = jnp.arange(OUT)[:, None]
    k_idx = jnp.arange(CM)[None, :]
    g = o_idx // out_per_group
    j = k_idx - g * in_per_group
    valid = (j >= 0) & (j < in_per_group)
    w_dense = jnp.where(valid, w2[o_idx, jnp.clip(j, 0, in_per_group - 1)], 0.0)
    scale = bn_gamma.astype(f32) / jnp.sqrt(bn_var.astype(f32) + eps)     # (OUT,)
    w_mc = w_dense.reshape(OUT, C, M).transpose(2, 0, 1) * scale[None, :, None]

    # conv bias + BN shift folded into one per-channel shift (kept f32).
    shift = ((conv_b.astype(f32) - bn_mean.astype(f32)) * scale
             + bn_beta.astype(f32)).reshape(OUT, 1)

    return noise_mc.astype(io_dtype), w_mc.astype(io_dtype), shift


def perturb_layer_apply(x, params, *, use_act=True, tile_pixels=None):
    """Hot path: x (N, C, H, W) NCHW -> (N, OUT, H, W). Only free reshapes + kernel."""
    noise_mc, w_mc, shift = params
    M, C, HW = noise_mc.shape
    OUT = w_mc.shape[1]
    N, Cx, H, W = x.shape
    assert Cx == C and H * W == HW
    io_dtype = noise_mc.dtype

    if tile_pixels is None:
        tile_pixels = _pick_tile_pixels(HW, N, C, M, OUT,
                                        jnp.dtype(io_dtype).itemsize)
    assert HW % tile_pixels == 0

    # NCHW -> (N, C, HW): contiguous reshape, no transpose. (In a real network
    # x would already arrive in io_dtype; the astype here is for the demo only.)
    x_cm = x.reshape(N, C, HW).astype(io_dtype)

    grid = (HW // tile_pixels, N)   # batch innermost: noise/W/shift blocks stay resident
    out_flat = pl.pallas_call(
        functools.partial(_perturb_kernel, nmasks=M, use_act=use_act),
        out_shape=jax.ShapeDtypeStruct((N, OUT, HW), io_dtype),
        grid_spec=pltpu.PrefetchScalarGridSpec(
            num_scalar_prefetch=0,
            grid=grid,
            in_specs=[
                pl.BlockSpec((1, C, tile_pixels), lambda p, n: (n, 0, p)),   # x
                pl.BlockSpec((M, C, tile_pixels), lambda p, n: (0, 0, p)),   # noise (pixel idx fixed!)
                pl.BlockSpec((M, OUT, C), lambda p, n: (0, 0, 0)),           # W (BN scale folded)
                pl.BlockSpec((OUT, 1), lambda p, n: (0, 0)),                 # shift
            ],
            out_specs=pl.BlockSpec((1, OUT, tile_pixels), lambda p, n: (n, 0, p)),
        ),
        compiler_params=pltpu.CompilerParams(
            dimension_semantics=("parallel", "parallel")),
    )(x_cm, noise_mc, w_mc, shift)

    # (N, OUT, HW) -> NCHW (free reshape)
    return out_flat.reshape(N, OUT, H, W)


def _reference(x, noise, level, conv_w, conv_b, bn_gamma, bn_beta, bn_mean,
               bn_var, *, nmasks, use_act, eps=1e-5):
    """Pure-JAX reference mirroring the PyTorch forward (inference BN)."""
    N, C, H, W = x.shape
    M = nmasks
    groups = C if M != 1 else 1
    y = x[:, :, None, :, :] + noise * level                 # (N, C, M, H, W)
    if use_act:
        y = jnp.maximum(y, 0.0)
    y = y.reshape(N, C * M, H, W)
    z = jax.lax.conv_general_dilated(
        y, conv_w, window_strides=(1, 1), padding='VALID',
        dimension_numbers=('NCHW', 'OIHW', 'NCHW'),
        feature_group_count=groups)
    z = z + conv_b[None, :, None, None]
    z = (z - bn_mean[None, :, None, None]) / jnp.sqrt(bn_var + eps)[None, :, None, None]
    z = z * bn_gamma[None, :, None, None] + bn_beta[None, :, None, None]
    return jnp.maximum(z, 0.0)


if __name__ == "__main__":
    # Module config: in_channels=4, out_channels=8, nmasks=4, level=0.1,
    # filter_size=0, use_act=True, act='relu', unique_masks=True,
    # noise_type='uniform', input_size=16, mix_maps=None.
    N, C, H, W = 2, 4, 16, 16
    OUT, M = 8, 4
    level = 0.1
    use_act = True

    key = jax.random.PRNGKey(0)
    ks = jax.random.split(key, 8)
    x = jax.random.normal(ks[0], (N, C, H, W), jnp.float32)
    # noise Parameter: (1, in_channels, nmasks, input_size, input_size), uniform(-1, 1)
    noise = jax.random.uniform(ks[1], (1, C, M, H, W), jnp.float32, -1.0, 1.0)
    # Conv2d(C*M -> OUT, k=1, groups=C): weight (OUT, M, 1, 1), bias (OUT,)
    conv_w = jax.random.normal(ks[2], (OUT, (C * M) // C, 1, 1), jnp.float32) * 0.1
    conv_b = jax.random.normal(ks[3], (OUT,), jnp.float32) * 0.1
    # BatchNorm2d(OUT) inference-mode parameters / running stats
    bn_gamma = jax.random.uniform(ks[4], (OUT,), jnp.float32, 0.5, 1.5)
    bn_beta = jax.random.normal(ks[5], (OUT,), jnp.float32) * 0.1
    bn_mean = jax.random.normal(ks[6], (OUT,), jnp.float32) * 0.1
    bn_var = jax.random.uniform(ks[7], (OUT,), jnp.float32, 0.5, 1.5)

    ref = _reference(x, noise, level, conv_w, conv_b, bn_gamma, bn_beta,
                     bn_mean, bn_var, nmasks=M, use_act=use_act)

    apply_fn = jax.jit(functools.partial(perturb_layer_apply, use_act=use_act))

    # f32 IO streams: strict check against the f32 reference.
    params_f32 = prepare_perturb_params(
        noise, level, conv_w, conv_b, bn_gamma, bn_beta, bn_mean, bn_var,
        in_channels=C, out_channels=OUT, nmasks=M, io_dtype=jnp.float32)
    out_f32 = jax.block_until_ready(apply_fn(x, params_f32))
    np.testing.assert_allclose(np.asarray(out_f32), np.asarray(ref),
                               rtol=1e-4, atol=1e-4)

    # bf16 IO streams (v6e/v7x HBM-bandwidth optimization): f32 accumulation,
    # so only input-quantization error remains -> loose tolerance.
    params_bf16 = prepare_perturb_params(
        noise, level, conv_w, conv_b, bn_gamma, bn_beta, bn_mean, bn_var,
        in_channels=C, out_channels=OUT, nmasks=M, io_dtype=jnp.bfloat16)
    out_bf16 = jax.block_until_ready(apply_fn(x, params_bf16))
    np.testing.assert_allclose(np.asarray(out_bf16.astype(jnp.float32)),
                               np.asarray(ref), rtol=1e-1, atol=1e-1)

    print("KERNEL_OK")
</pallas_src>

<mosaic_0001>
module attributes {stable_mosaic.version = 11 : i64} {
  func.func @_perturb_kernel(%arg0: i32, %arg1: i32, %arg2: memref<1x4x256xf32, #tpu.memory_space<vmem>>, %arg3: memref<4x4x256xf32, #tpu.memory_space<vmem>>, %arg4: memref<4x8x4xf32, #tpu.memory_space<vmem>>, %arg5: memref<8x1xf32, #tpu.memory_space<vmem>>, %arg6: memref<1x8x256xf32, #tpu.memory_space<vmem>>) attributes {dimension_semantics = [#tpu.dimension_semantics<parallel>, #tpu.dimension_semantics<parallel>], iteration_bounds = array<i64: 1, 2>, scalar_prefetch = 0 : i64, scratch_operands = 0 : i64, tpu.core_type = #tpu.core_type<tc>, window_params = [{transform_indices = @transform_0, window_bounds = array<i64: 1, 4, 256>}, {transform_indices = @transform_1, window_bounds = array<i64: 4, 4, 256>}, {pipeline_mode = #tpu.pipeline_mode<synchronous>, transform_indices = @transform_2, window_bounds = array<i64: 4, 8, 4>}, {pipeline_mode = #tpu.pipeline_mode<synchronous>, transform_indices = @transform_3, window_bounds = array<i64: 8, 1>}, {transform_indices = @transform_4, window_bounds = array<i64: 1, 8, 256>}]} {
    %c0 = arith.constant 0 : index
    %c0_0 = arith.constant 0 : index
    %c0_1 = arith.constant 0 : index
    %0 = vector.load %arg2[%c0, %c0_0, %c0_1] : memref<1x4x256xf32, #tpu.memory_space<vmem>>, vector<1x4x256xf32>
    %1 = vector.shape_cast %0 : vector<1x4x256xf32> to vector<4x256xf32>
    %c0_2 = arith.constant 0 : index
    %c0_3 = arith.constant 0 : index
    %c0_4 = arith.constant 0 : index
    %2 = vector.load %arg3[%c0_2, %c0_3, %c0_4] : memref<4x4x256xf32, #tpu.memory_space<vmem>>, vector<1x4x256xf32>
    %3 = vector.shape_cast %2 : vector<1x4x256xf32> to vector<4x256xf32>
    %4 = arith.addf %1, %3 : vector<4x256xf32>
    %cst = arith.constant 0.000000e+00 : f32
    %5 = vector.broadcast %cst : f32 to vector<4x256xf32>
    %6 = arith.maximumf %4, %5 : vector<4x256xf32>
    %c0_5 = arith.constant 0 : index
    %c0_6 = arith.constant 0 : index
    %c0_7 = arith.constant 0 : index
    %7 = vector.load %arg4[%c0_5, %c0_6, %c0_7] : memref<4x8x4xf32, #tpu.memory_space<vmem>>, vector<1x8x4xf32>
    %8 = vector.shape_cast %7 : vector<1x8x4xf32> to vector<8x4xf32>
    %cst_8 = arith.constant dense<0.000000e+00> : vector<8x256xf32>
    %9 = tpu.matmul %8, %6, %cst_8 {dimension_numbers = #tpu.dot_dimension_numbers<[1], [0], [0], [1], [0, 0, 1, 1], [], []>} : vector<8x4xf32>, vector<4x256xf32>, vector<8x256xf32> -> vector<8x256xf32>
    %c1 = arith.constant 1 : index
    %c0_9 = arith.constant 0 : index
    %c0_10 = arith.constant 0 : index
    %10 = vector.load %arg3[%c1, %c0_9, %c0_10] : memref<4x4x256xf32, #tpu.memory_space<vmem>>, vector<1x4x256xf32>
    %11 = vector.shape_cast %10 : vector<1x4x256xf32> to vector<4x256xf32>
    %12 = arith.addf %1, %11 : vector<4x256xf32>
    %cst_11 = arith.constant 0.000000e+00 : f32
    %13 = vector.broadcast %cst_11 : f32 to vector<4x256xf32>
    %14 = arith.maximumf %12, %13 : vector<4x256xf32>
    %c1_12 = arith.constant 1 : index
    %c0_13 = arith.constant 0 : index
    %c0_14 = arith.constant 0 : index
    %15 = vector.load %arg4[%c1_12, %c0_13, %c0_14] : memref<4x8x4xf32, #tpu.memory_space<vmem>>, vector<1x8x4xf32>
    %16 = vector.shape_cast %15 : vector<1x8x4xf32> to vector<8x4xf32>
    %cst_15 = arith.constant dense<0.000000e+00> : vector<8x256xf32>
    %17 = tpu.matmul %16, %14, %cst_15 {dimension_numbers = #tpu.dot_dimension_numbers<[1], [0], [0], [1], [0, 0, 1, 1], [], []>} : vector<8x4xf32>, vector<4x256xf32>, vector<8x256xf32> -> vector<8x256xf32>
    %18 = arith.addf %9, %17 : vector<8x256xf32>
    %c2 = arith.constant 2 : index
    %c0_16 = arith.constant 0 : index
    %c0_17 = arith.constant 0 : index
    %19 = vector.load %arg3[%c2, %c0_16, %c0_17] : memref<4x4x256xf32, #tpu.memory_space<vmem>>, vector<1x4x256xf32>
    %20 = vector.shape_cast %19 : vector<1x4x256xf32> to vector<4x256xf32>
    %21 = arith.addf %1, %20 : vector<4x256xf32>
    %cst_18 = arith.constant 0.000000e+00 : f32
    %22 = vector.broadcast %cst_18 : f32 to vector<4x256xf32>
    %23 = arith.maximumf %21, %22 : vector<4x256xf32>
    %c2_19 = arith.constant 2 : index
    %c0_20 = arith.constant 0 : index
    %c0_21 = arith.constant 0 : index
    %24 = vector.load %arg4[%c2_19, %c0_20, %c0_21] : memref<4x8x4xf32, #tpu.memory_space<vmem>>, vector<1x8x4xf32>
    %25 = vector.shape_cast %24 : vector<1x8x4xf32> to vector<8x4xf32>
    %cst_22 = arith.constant dense<0.000000e+00> : vector<8x256xf32>
    %26 = tpu.matmul %25, %23, %cst_22 {dimension_numbers = #tpu.dot_dimension_numbers<[1], [0], [0], [1], [0, 0, 1, 1], [], []>} : vector<8x4xf32>, vector<4x256xf32>, vector<8x256xf32> -> vector<8x256xf32>
    %27 = arith.addf %18, %26 : vector<8x256xf32>
    %c3 = arith.constant 3 : index
    %c0_23 = arith.constant 0 : index
    %c0_24 = arith.constant 0 : index
    %28 = vector.load %arg3[%c3, %c0_23, %c0_24] : memref<4x4x256xf32, #tpu.memory_space<vmem>>, vector<1x4x256xf32>
    %29 = vector.shape_cast %28 : vector<1x4x256xf32> to vector<4x256xf32>
    %30 = arith.addf %1, %29 : vector<4x256xf32>
    %cst_25 = arith.constant 0.000000e+00 : f32
    %31 = vector.broadcast %cst_25 : f32 to vector<4x256xf32>
    %32 = arith.maximumf %30, %31 : vector<4x256xf32>
    %c3_26 = arith.constant 3 : index
    %c0_27 = arith.constant 0 : index
    %c0_28 = arith.constant 0 : index
    %33 = vector.load %arg4[%c3_26, %c0_27, %c0_28] : memref<4x8x4xf32, #tpu.memory_space<vmem>>, vector<1x8x4xf32>
    %34 = vector.shape_cast %33 : vector<1x8x4xf32> to vector<8x4xf32>
    %cst_29 = arith.constant dense<0.000000e+00> : vector<8x256xf32>
    %35 = tpu.matmul %34, %32, %cst_29 {dimension_numbers = #tpu.dot_dimension_numbers<[1], [0], [0], [1], [0, 0, 1, 1], [], []>} : vector<8x4xf32>, vector<4x256xf32>, vector<8x256xf32> -> vector<8x256xf32>
    %36 = arith.addf %27, %35 : vector<8x256xf32>
    %c0_30 = arith.constant 0 : index
    %c0_31 = arith.constant 0 : index
    %37 = vector.load %arg5[%c0_30, %c0_31] : memref<8x1xf32, #tpu.memory_space<vmem>>, vector<8x1xf32>
    %38 = vector.broadcast %37 : vector<8x1xf32> to vector<8x256xf32>
    %39 = arith.addf %36, %38 : vector<8x256xf32>
    %cst_32 = arith.constant 0.000000e+00 : f32
    %40 = vector.broadcast %cst_32 : f32 to vector<8x256xf32>
    %41 = arith.maximumf %39, %40 : vector<8x256xf32>
    %c0_33 = arith.constant 0 : index
    %c0_34 = arith.constant 0 : index
    %c0_35 = arith.constant 0 : index
    %42 = vector.load %arg6[%c0_33, %c0_34, %c0_35] : memref<1x8x256xf32, #tpu.memory_space<vmem>>, vector<1x8x256xf32>
    %43 = vector.shape_cast %42 : vector<1x8x256xf32> to vector<8x256xf32>
    %44 = vector.shape_cast %41 : vector<8x256xf32> to vector<1x8x256xf32>
    tpu.vector_store %arg6[%c0_33, %c0_34, %c0_35], %44 {strides = array<i32>} : memref<1x8x256xf32, #tpu.memory_space<vmem>>, vector<1x8x256xf32>,
    return
  }
  func.func @transform_0(%arg0: i32, %arg1: i32) -> (i32, i32, i32) {
    %c0_i32 = arith.constant 0 : i32
    %c0_i32_0 = arith.constant 0 : i32
    return %arg1, %c0_i32, %arg0 : i32, i32, i32
  }
  func.func @transform_1(%arg0: i32, %arg1: i32) -> (i32, i32, i32) {
    %c0_i32 = arith.constant 0 : i32
    %c0_i32_0 = arith.constant 0 : i32
    %c0_i32_1 = arith.constant 0 : i32
    return %c0_i32, %c0_i32_0, %arg0 : i32, i32, i32
  }
  func.func @transform_2(%arg0: i32, %arg1: i32) -> (i32, i32, i32) {
    %c0_i32 = arith.constant 0 : i32
    %c0_i32_0 = arith.constant 0 : i32
    %c0_i32_1 = arith.constant 0 : i32
    %c0_i32_2 = arith.constant 0 : i32
    return %c0_i32, %c0_i32_0, %c0_i32_1 : i32, i32, i32
  }
  func.func @transform_3(%arg0: i32, %arg1: i32) -> (i32, i32) {
    %c0_i32 = arith.constant 0 : i32
    %c0_i32_0 = arith.constant 0 : i32
    %c0_i32_1 = arith.constant 0 : i32
    return %c0_i32, %c0_i32_0 : i32, i32
  }
  func.func @transform_4(%arg0: i32, %arg1: i32) -> (i32, i32, i32) {
    %c0_i32 = arith.constant 0 : i32
    %c0_i32_0 = arith.constant 0 : i32
    return %arg1, %c0_i32, %arg0 : i32, i32, i32
  }
}

</mosaic_0001>

<llo_original>
// kernel: perturb_layer_apply.1
$region0: #{perturb_layer_apply.1}
  #allocation0 [shape = 'u32[]', space=smem, size = 0x4, offset = 0x4, fixed_abs, tag = 'smem constant byte address 0x4 - core index']
  #allocation1 [shape = 'u32[72,128]{1,0:T(1,128)}', space=vmem, size = 0x9000, scoped, tag = 'internal scratch']
  %s0 = inlined_call_operand.vmem [shape: f32[2,4,256], index: 0, kind: input, shape index: {}]
  %s1 = inlined_call_operand.vmem [shape: f32[4,4,256], index: 1, kind: input, shape index: {}]
  %s2 = inlined_call_operand.vmem [shape: f32[4,8,4], index: 2, kind: input, shape index: {}]
  %s3 = inlined_call_operand.vmem [shape: f32[8,1], index: 3, kind: input, shape index: {}]
  %s4 = inlined_call_operand.vmem [shape: f32[2,8,256], index: 4, kind: output, shape index: {}]
  %s5 = sld [smem:[#allocation0]]
  $region49: #{perturb_layer_apply.1} parent=0
    _
  %s7 = ssub.s32 1, %s5
  %s8 = scalar_select 0, %s7, %s5
  loop: start=0, step=1, limit=4
  $region2: #{perturb_layer_apply.1} parent=0 // loop_pre_header
    _
  $region3: #{perturb_layer_apply.1} parent=0 // loop_header
    %s10 = sphi 0, %s14
    %p11 = scmp.ge.s32.totalorder %s10, 4
    %s17 = sphi 0, %s29
    %s18 = sphi 0, %s25
    %s19 = sphi 0, %s17
    %s20 = sphi 0, %s18
    %s21 = sphi 0, %s19
    %s22 = sphi 0, %s20
    %s34 = sphi 0, %s36
    %s37 = sphi 0, %s34
    %s38 = sphi 0, %s37
    %s54 = sphi 0, %s38
    %s60 = sphi 0, %s62
    %s63 = sphi 0, %s60
    %s64 = sphi 0, %s63
    %s80 = sphi 0, %s64
    %s84 = sphi 0, %s84
    %s86 = sphi 0, %s84
    %s87 = sphi 0, %s86
    %s101 = sphi 0, %s87
    %s105 = sphi 0, %s105
    %s107 = sphi 0, %s105
    %s108 = sphi 0, %s107
    %s122 = sphi 0, %s108
    %s130 = sphi 0, %s132
    %s133 = sphi 0, %s130
    %s134 = sphi 0, %s133
    %s150 = sphi 0, %s134
  $region4: #{perturb_layer_apply.1} parent=0 // loop_header_branch
    %13 = sbr.rel (%p11) target = $region8
  $region5: #{perturb_layer_apply.1} parent=0 // loop_body
    %s15 = ssub.s32 %s10, 1
    %s16 = ssub.s32 %s10, 2
    %s23 = sadd.s32 1, %s18
    %p24 = scmp.ge.s32.totalorder %s23, 2
    %s25 = scalar_select %p24, 0, %s23
    %s26 = sadd.s32 1, %s17
    %s27 = scalar_select %p24, %s26, %s17
    %p28 = scmp.ge.s32.totalorder %s27, 1
    %s29 = scalar_select %p28, 0, %s27
    %s30 = ssub.s32 %s18, %s25
    %s31 = ssub.s32 %s17, %s29
    %s32 = sor.u32 %s30, %s31
    %p33 = scmp.eq.s32.totalorder %s32, 0
    %s35 = sadd.s32 %s34, 1
    %s36 = scalar_select %p33, %s34, %s35
    %p39 = pneg %p33
    %p40 = scmp.eq.s32.totalorder %s10, 1
    %p41 = por %p39, %p40
    %p42 = scmp.ne.s32.totalorder %s34, %s37
    %p43 = scmp.eq.s32.totalorder %s10, 0
    %p44 = por %p42, %p43
    %p45 = scmp.ne.s32.totalorder %s34, %s37
    %p46 = scmp.eq.s32.totalorder %s15, 1
    %p47 = por %p45, %p46
    %p48 = scmp.ne.s32.totalorder %s37, %s38
    %p49 = scmp.eq.s32.totalorder %s15, 0
    %p50 = por %p48, %p49
    %p51 = scmp.ne.s32.totalorder %s37, %s38
    %p52 = scmp.eq.s32.totalorder %s16, 1
    %p53 = por %p51, %p52
    %p55 = scmp.ne.s32.totalorder %s38, %s54
    %p56 = scmp.eq.s32.totalorder %s16, 0
    %p57 = por %p55, %p56
    %s58 = ssub.s32 %s17, %s29
    %p59 = scmp.eq.s32.totalorder %s58, 0
    %s61 = sadd.s32 %s60, 1
    %s62 = scalar_select %p59, %s60, %s61
    %p65 = pneg %p59
    %p66 = scmp.eq.s32.totalorder %s10, 1
    %p67 = por %p65, %p66
    %p68 = scmp.ne.s32.totalorder %s60, %s63
    %p69 = scmp.eq.s32.totalorder %s10, 0
    %p70 = por %p68, %p69
    %p71 = scmp.ne.s32.totalorder %s60, %s63
    %p72 = scmp.eq.s32.totalorder %s15, 1
    %p73 = por %p71, %p72
    %p74 = scmp.ne.s32.totalorder %s63, %s64
    %p75 = scmp.eq.s32.totalorder %s15, 0
    %p76 = por %p74, %p75
    %p77 = scmp.ne.s32.totalorder %s63, %s64
    %p78 = scmp.eq.s32.totalorder %s16, 1
    %p79 = por %p77, %p78
    %p81 = scmp.ne.s32.totalorder %s64, %s80
    %p82 = scmp.eq.s32.totalorder %s16, 0
    %p83 = por %p81, %p82
    %s85 = sadd.s32 %s84, 1
    %p88 = scmp.eq.s32.totalorder %s10, 1
    %p89 = scmp.ne.s32.totalorder %s84, %s86
    %p90 = scmp.eq.s32.totalorder %s10, 0
    %p91 = por %p89, %p90
    %p92 = scmp.ne.s32.totalorder %s84, %s86
    %p93 = scmp.eq.s32.totalorder %s15, 1
    %p94 = por %p92, %p93
    %p95 = scmp.ne.s32.totalorder %s86, %s87
    %p96 = scmp.eq.s32.totalorder %s15, 0
    %p97 = por %p95, %p96
    %p98 = scmp.ne.s32.totalorder %s86, %s87
    %p99 = scmp.eq.s32.totalorder %s16, 1
    %p100 = por %p98, %p99
    %p102 = scmp.ne.s32.totalorder %s87, %s101
    %p103 = scmp.eq.s32.totalorder %s16, 0
    %p104 = por %p102, %p103
    %s106 = sadd.s32 %s105, 1
    %p109 = scmp.eq.s32.totalorder %s10, 1
    %p110 = scmp.ne.s32.totalorder %s105, %s107
    %p111 = scmp.eq.s32.totalorder %s10, 0
    %p112 = por %p110, %p111
    %p113 = scmp.ne.s32.totalorder %s105, %s107
    %p114 = scmp.eq.s32.totalorder %s15, 1
    %p115 = por %p113, %p114
    %p116 = scmp.ne.s32.totalorder %s107, %s108
    %p117 = scmp.eq.s32.totalorder %s15, 0
    %p118 = por %p116, %p117
    %p119 = scmp.ne.s32.totalorder %s107, %s108
    %p120 = scmp.eq.s32.totalorder %s16, 1
    %p121 = por %p119, %p120
    %p123 = scmp.ne.s32.totalorder %s108, %s122
    %p124 = scmp.eq.s32.totalorder %s16, 0
    %p125 = por %p123, %p124
    %s126 = ssub.s32 %s18, %s25
    %s127 = ssub.s32 %s17, %s29
    %s128 = sor.u32 %s126, %s127
    %p129 = scmp.eq.s32.totalorder %s128, 0
    %s131 = sadd.s32 %s130, 1
    %s132 = scalar_select %p129, %s130, %s131
    %p135 = pneg %p129
    %p136 = scmp.eq.s32.totalorder %s10, 1
    %p137 = por %p135, %p136
    %p138 = scmp.ne.s32.totalorder %s130, %s133
    %p139 = scmp.eq.s32.totalorder %s10, 0
    %p140 = por %p138, %p139
    %p141 = scmp.ne.s32.totalorder %s130, %s133
    %p142 = scmp.eq.s32.totalorder %s15, 1
    %p143 = por %p141, %p142
    %p144 = scmp.ne.s32.totalorder %s133, %s134
    %p145 = scmp.eq.s32.totalorder %s15, 0
    %p146 = por %p144, %p145
    %p147 = scmp.ne.s32.totalorder %s133, %s134
    %p148 = scmp.eq.s32.totalorder %s16, 1
    %p149 = por %p147, %p148
    %p151 = scmp.ne.s32.totalorder %s134, %s150
    %p152 = scmp.eq.s32.totalorder %s16, 0
    %p153 = por %p151, %p152
    %p154 = scmp.le.s32.totalorder 1, %s10
    %p155 = scmp.lt.s32.totalorder %s10, 3
    %p156 = pnand %p154, %p155
    %p157 = pneg %p156
    // Predicated region
    $region9: #{perturb_layer_apply.1} parent=5 // pred_check
      _
    $region10: #{perturb_layer_apply.1} parent=5 // pred_check_branch
      %159 = sbr.rel (%p156) target = $region12
    $region11: #{perturb_layer_apply.1} parent=5 // pred_region
      %s160 = ssub.s32 %s10, 1
      // Predicated region
      $region13: #{perturb_layer_apply.1} parent=11 // pred_check
        %p161 = pneg %p76
      $region14: #{perturb_layer_apply.1} parent=11 // pred_check_branch
        %163 = sbr.rel (%p161) target = $region16
      $region15: #{perturb_layer_apply.1} parent=11 // pred_region
        %s164 = smul.u32 2, %s19
        %p165 = scmp.lt.s32.totalorder %s164, 1
        %s166 = scalar_select %p165, %s164, 1
        %s167 = smul.addr %s166, 4
        %s168 = scalar_lea.vmem %s1, %s167
        %s169 = smul.u32 2, %s19
      $region16: #{perturb_layer_apply.1} parent=11 // pred_fallthru
        _
      // Predicated region
      $region17: #{perturb_layer_apply.1} parent=11 // pred_check
        %p170 = pneg %p97
      $region18: #{perturb_layer_apply.1} parent=11 // pred_check_branch
        %172 = sbr.rel (%p170) target = $region20
      $region19: #{perturb_layer_apply.1} parent=11 // pred_region
        _
      $region20: #{perturb_layer_apply.1} parent=11 // pred_fallthru
        _
      // Predicated region
      $region21: #{perturb_layer_apply.1} parent=11 // pred_check
        %p173 = pneg %p118
      $region22: #{perturb_layer_apply.1} parent=11 // pred_check_branch
        %175 = sbr.rel (%p173) target = $region24
      $region23: #{perturb_layer_apply.1} parent=11 // pred_region
        _
      $region24: #{perturb_layer_apply.1} parent=11 // pred_fallthru
        _
    $region12: #{perturb_layer_apply.1} parent=5 // pred_fallthru
      _
    %p176 = scmp.lt.s32.totalorder %s10, 2
    // Predicated region
    $region25: #{perturb_layer_apply.1} parent=5 // pred_check
      %p177 = pneg %p176
    $region26: #{perturb_layer_apply.1} parent=5 // pred_check_branch
      %179 = sbr.rel (%p177) target = $region28
    $region27: #{perturb_layer_apply.1} parent=5 // pred_region
      // Predicated region
      $region29: #{perturb_layer_apply.1} parent=27 // pred_check
        %p180 = pneg %p44
      $region30: #{perturb_layer_apply.1} parent=27 // pred_check_branch
        %182 = sbr.rel (%p180) target = $region32
      $region31: #{perturb_layer_apply.1} parent=27 // pred_region
        %s183 = smul.u32 2, %s17
        %p184 = scmp.lt.s32.totalorder %s18, 1
        %s185 = scalar_select %p184, %s18, 1
        %p186 = scmp.lt.s32.totalorder %s183, 1
        %s187 = scalar_select %p186, %s183, 1
        %s188 = smul.addr %s185, 2
        %s189 = sadd.s32 %s187, %s188
        %s190 = smul.addr %s189, 4
        %s191 = scalar_lea.vmem %s0, %s190
        %s192 = smul.u32 2, %s17
      $region32: #{perturb_layer_apply.1} parent=27 // pred_fallthru
        _
    $region28: #{perturb_layer_apply.1} parent=5 // pred_fallthru
      _
    %p193 = scmp.le.s32.totalorder 1, %s10
    %p194 = scmp.lt.s32.totalorder %s10, 3
    %p195 = pnand %p193, %p194
    %p196 = pneg %p195
    // Predicated region
    $region33: #{perturb_layer_apply.1} parent=5 // pred_check
      _
    $region34: #{perturb_layer_apply.1} parent=5 // pred_check_branch
      %198 = sbr.rel (%p195) target = $region36
    $region35: #{perturb_layer_apply.1} parent=5 // pred_region
      %s199 = ssub.s32 %s10, 1
      %s200 = smul.u32 2, %s19
      %p201 = scmp.lt.s32.totalorder %s20, 1
      %s202 = scalar_select %p201, %s20, 1
      %p203 = scmp.lt.s32.totalorder %s200, 1
      %s204 = scalar_select %p203, %s200, 1
      %s205 = smul.addr %s202, 2
      %s206 = sadd.s32 %s204, %s205
      %s207 = smul.addr %s206, 4
      %s208 = scalar_lea.vmem %s0, %s207
      %p209 = pneg %p50
      %p210 = pneg %p47
      %s211 = smul.u32 2, %s19
      %p212 = scmp.lt.s32.totalorder %s211, 1
      %s213 = scalar_select %p212, %s211, 1
      %s214 = smul.addr %s213, 4
      %s215 = scalar_lea.vmem %s1, %s214
      %p216 = pneg %p76
      %p217 = pneg %p73
      %p218 = pneg %p97
      %p219 = pneg %p94
      %p220 = pneg %p118
      %p221 = pneg %p115
      %p222 = pneg %p146
      %p223 = pneg %p143
      %s224 = smul.u32 2, %s19
      %p225 = scmp.lt.s32.totalorder %s20, 1
      %s226 = scalar_select %p225, %s20, 1
      %p227 = scmp.lt.s32.totalorder %s224, 1
      %s228 = scalar_select %p227, %s224, 1
      %s229 = smul.addr %s226, 2
      %s230 = sadd.s32 %s228, %s229
      %s231 = smul.addr %s230, 8
      %s232 = scalar_lea.vmem %s4, %s231
      %s233 = smul.u32 2, %s19
      %p234 = scmp.lt.s32.totalorder %s20, 1
      %s235 = scalar_select %p234, %s20, 1
      %p236 = scmp.lt.s32.totalorder %s233, 1
      %s237 = scalar_select %p236, %s233, 1
      %s238 = smul.addr %s235, 2
      %s239 = sadd.s32 %s237, %s238
      %s240 = smul.addr %s239, 4
      %s241 = scalar_lea.vmem %s0, %s240
      %s242 = smul.u32 2, %s19
      %s243 = smul.u32 2, %s19
      %p244 = scmp.lt.s32.totalorder %s243, 1
      %s245 = scalar_select %p244, %s243, 1
      %s246 = smul.addr %s245, 4
      %s247 = scalar_lea.vmem %s1, %s246
      %s248 = smul.u32 2, %s19
      %s249 = smul.u32 2, %s19
      %p250 = scmp.lt.s32.totalorder %s20, 1
      %s251 = scalar_select %p250, %s20, 1
      %p252 = scmp.lt.s32.totalorder %s249, 1
      %s253 = scalar_select %p252, %s249, 1
      %s254 = smul.addr %s251, 2
      %s255 = sadd.s32 %s253, %s254
      %s256 = smul.addr %s255, 8
      %s257 = scalar_lea.vmem %s4, %s256
      %s258 = smul.u32 2, %s19
      %v259 = vld [vmem:[%s241] sm:$0xff]
      %v260 = vld [vmem:[%s247] sm:$0xff]
      %v261 = vadd.f32 %v259, %v260
      %v262 = vmax.f32 %v261, 0.0
      %v263 = vld [vmem:[%s2] sm:$0xff]
      %s264 = scalar_lea.vmem %s247, 8
      %v265 = vld [vmem:[%s264] sm:$0xff]
      %v266 = vadd.f32 %v259, %v265
      %v267 = vmax.f32 %v266, 0.0
      %s268 = scalar_lea.vmem %s2, 8
      %v269 = vld [vmem:[%s268] sm:$0xff]
      %271 = vst [vmem:[#allocation1] ss:$2 sm:$0xff] %v267
      %v272 = vld.sshfl [vmem:[#allocation1] sm:$0xff pattern:$0x75316420]
      %v273 = vld.sshfl [vmem:[#allocation1 + $0x8] sm:$0xff pattern:$0x75316420]
      %vm274 = vcmask 31744
      %v276 = vsel %vm274, %v269, 0
      %vm278 = vcmask 1043456
      %v279 = vsel %vm278, %v272, 0
      %v281 = vsel %vm278, %v273, 0
      %283 = vmatpush.msra.mxu0 0.0
      %284 = vmatpush.msra.mxu0 0.0
      %285 = vmatpush.msra.mxu0 0.0
      %286 = vmatpush.msra.mxu0 0.0
      %287 = vmatpush.msra.mxu0 0.0
      %288 = vmatpush.msra.mxu0 0.0
      %289 = vmatpush.msra.mxu0 0.0
      %290 = vmatpush.msra.mxu0 0.0
      %291 = vmatpush.msra.mxu0 0.0
      %292 = vmatpush.msra.mxu0 0.0
      %293 = vmatpush.msra.mxu0 0.0
      %294 = vmatpush.msra.mxu0 0.0
      %295 = vmatpush.msra.mxu0 0.0
      %296 = vmatpush.msra.mxu0 0.0
      %297 = vmatpush.msra.mxu0 0.0
      %298 = vmatpush.msra.mxu0 %v279
      %299 = vmatmul.f32.gmra.mxu0 %v276
      %v300 = vpop.f32.mrf.mxu0
      %v301 = vadd.f32 0.0, %v300
      %302 = vdwg.mxu0
      %303 = vmatpush.msra.mxu0 0.0
      %304 = vmatpush.msra.mxu0 0.0
      %305 = vmatpush.msra.mxu0 0.0
      %306 = vmatpush.msra.mxu0 0.0
      %307 = vmatpush.msra.mxu0 0.0
      %308 = vmatpush.msra.mxu0 0.0
      %309 = vmatpush.msra.mxu0 0.0
      %310 = vmatpush.msra.mxu0 0.0
      %311 = vmatpush.msra.mxu0 0.0
      %312 = vmatpush.msra.mxu0 0.0
      %313 = vmatpush.msra.mxu0 0.0
      %314 = vmatpush.msra.mxu0 0.0
      %315 = vmatpush.msra.mxu0 0.0
      %316 = vmatpush.msra.mxu0 0.0
      %317 = vmatpush.msra.mxu0 0.0
      %318 = vmatpush.msra.mxu0 %v281
      %319 = vmatmul.f32.gmra.mxu0 %v276
      %v320 = vpop.f32.mrf.mxu0
      %v321 = vadd.f32 0.0, %v320
      %322 = vdwg.mxu0
      %324 = vst [vmem:[#allocation1] ss:$2 sm:$0xff] %v262
      %v325 = vld.sshfl [vmem:[#allocation1] sm:$0xff pattern:$0x75316420]
      %v326 = vld.sshfl [vmem:[#allocation1 + $0x8] sm:$0xff pattern:$0x75316420]
      %v328 = vsel %vm274, %v263, 0
      %v330 = vsel %vm278, %v325, 0
      %v332 = vsel %vm278, %v326, 0
      %334 = vmatpush.msra.mxu0 0.0
      %335 = vmatpush.msra.mxu0 0.0
      %336 = vmatpush.msra.mxu0 0.0
      %337 = vmatpush.msra.mxu0 0.0
      %338 = vmatpush.msra.mxu0 0.0
      %339 = vmatpush.msra.mxu0 0.0
      %340 = vmatpush.msra.mxu0 0.0
      %341 = vmatpush.msra.mxu0 0.0
      %342 = vmatpush.msra.mxu0 0.0
      %343 = vmatpush.msra.mxu0 0.0
      %344 = vmatpush.msra.mxu0 0.0
      %345 = vmatpush.msra.mxu0 0.0
      %346 = vmatpush.msra.mxu0 0.0
      %347 = vmatpush.msra.mxu0 0.0
      %348 = vmatpush.msra.mxu0 0.0
      %349 = vmatpush.msra.mxu0 %v330
      %350 = vmatmul.f32.gmra.mxu0 %v328
      %v351 = vpop.f32.mrf.mxu0
      %v352 = vadd.f32 %v301, %v351
      %353 = vdwg.mxu0
      %354 = vmatpush.msra.mxu0 0.0
      %355 = vmatpush.msra.mxu0 0.0
      %356 = vmatpush.msra.mxu0 0.0
      %357 = vmatpush.msra.mxu0 0.0
      %358 = vmatpush.msra.mxu0 0.0
      %359 = vmatpush.msra.mxu0 0.0
      %360 = vmatpush.msra.mxu0 0.0
      %361 = vmatpush.msra.mxu0 0.0
      %362 = vmatpush.msra.mxu0 0.0
      %363 = vmatpush.msra.mxu0 0.0
      %364 = vmatpush.msra.mxu0 0.0
      %365 = vmatpush.msra.mxu0 0.0
      %366 = vmatpush.msra.mxu0 0.0
      %367 = vmatpush.msra.mxu0 0.0
      %368 = vmatpush.msra.mxu0 0.0
      %369 = vmatpush.msra.mxu0 %v332
      %370 = vmatmul.f32.gmra.mxu0 %v328
      %v371 = vpop.f32.mrf.mxu0
      %v372 = vadd.f32 %v321, %v371
      %373 = vdwg.mxu0
      %s374 = scalar_lea.vmem %s247, 16
      %v375 = vld [vmem:[%s374] sm:$0xff]
      %v376 = vadd.f32 %v259, %v375
      %v377 = vmax.f32 %v376, 0.0
      %s378 = scalar_lea.vmem %s2, 16
      %v379 = vld [vmem:[%s378] sm:$0xff]
      %381 = vst [vmem:[#allocation1] ss:$2 sm:$0xff] %v377
      %v382 = vld.sshfl [vmem:[#allocation1] sm:$0xff pattern:$0x75316420]
      %v383 = vld.sshfl [vmem:[#allocation1 + $0x8] sm:$0xff pattern:$0x75316420]
      %v385 = vsel %vm274, %v379, 0
      %v387 = vsel %vm278, %v382, 0
      %v389 = vsel %vm278, %v383, 0
      %391 = vmatpush.msra.mxu0 0.0
      %392 = vmatpush.msra.mxu0 0.0
      %393 = vmatpush.msra.mxu0 0.0
      %394 = vmatpush.msra.mxu0 0.0
      %395 = vmatpush.msra.mxu0 0.0
      %396 = vmatpush.msra.mxu0 0.0
      %397 = vmatpush.msra.mxu0 0.0
      %398 = vmatpush.msra.mxu0 0.0
      %399 = vmatpush.msra.mxu0 0.0
      %400 = vmatpush.msra.mxu0 0.0
      %401 = vmatpush.msra.mxu0 0.0
      %402 = vmatpush.msra.mxu0 0.0
      %403 = vmatpush.msra.mxu0 0.0
      %404 = vmatpush.msra.mxu0 0.0
      %405 = vmatpush.msra.mxu0 0.0
      %406 = vmatpush.msra.mxu0 %v387
      %407 = vmatmul.f32.gmra.mxu0 %v385
      %v408 = vpop.f32.mrf.mxu0
      %v409 = vadd.f32 0.0, %v408
      %410 = vdwg.mxu0
      %411 = vmatpush.msra.mxu0 0.0
      %412 = vmatpush.msra.mxu0 0.0
      %413 = vmatpush.msra.mxu0 0.0
      %414 = vmatpush.msra.mxu0 0.0
      %415 = vmatpush.msra.mxu0 0.0
      %416 = vmatpush.msra.mxu0 0.0
      %417 = vmatpush.msra.mxu0 0.0
      %418 = vmatpush.msra.mxu0 0.0
      %419 = vmatpush.msra.mxu0 0.0
      %420 = vmatpush.msra.mxu0 0.0
      %421 = vmatpush.msra.mxu0 0.0
      %422 = vmatpush.msra.mxu0 0.0
      %423 = vmatpush.msra.mxu0 0.0
      %424 = vmatpush.msra.mxu0 0.0
      %425 = vmatpush.msra.mxu0 0.0
      %426 = vmatpush.msra.mxu0 %v389
      %427 = vmatmul.f32.gmra.mxu0 %v385
      %v428 = vpop.f32.mrf.mxu0
      %v429 = vadd.f32 0.0, %v428
      %430 = vdwg.mxu0
      %v431 = vadd.f32 %v352, %v409
      %v432 = vadd.f32 %v372, %v429
      %s433 = scalar_lea.vmem %s247, 24
      %v434 = vld [vmem:[%s433] sm:$0xff]
      %v435 = vadd.f32 %v259, %v434
      %v436 = vmax.f32 %v435, 0.0
      %s437 = scalar_lea.vmem %s2, 24
      %v438 = vld [vmem:[%s437] sm:$0xff]
      %440 = vst [vmem:[#allocation1] ss:$2 sm:$0xff] %v436
      %v441 = vld.sshfl [vmem:[#allocation1] sm:$0xff pattern:$0x75316420]
      %v442 = vld.sshfl [vmem:[#allocation1 + $0x8] sm:$0xff pattern:$0x75316420]
      %v444 = vsel %vm274, %v438, 0
      %v446 = vsel %vm278, %v441, 0
      %v448 = vsel %vm278, %v442, 0
      %450 = vmatpush.msra.mxu0 0.0
      %451 = vmatpush.msra.mxu0 0.0
      %452 = vmatpush.msra.mxu0 0.0
      %453 = vmatpush.msra.mxu0 0.0
      %454 = vmatpush.msra.mxu0 0.0
      %455 = vmatpush.msra.mxu0 0.0
      %456 = vmatpush.msra.mxu0 0.0
      %457 = vmatpush.msra.mxu0 0.0
      %458 = vmatpush.msra.mxu0 0.0
      %459 = vmatpush.msra.mxu0 0.0
      %460 = vmatpush.msra.mxu0 0.0
      %461 = vmatpush.msra.mxu0 0.0
      %462 = vmatpush.msra.mxu0 0.0
      %463 = vmatpush.msra.mxu0 0.0
      %464 = vmatpush.msra.mxu0 0.0
      %465 = vmatpush.msra.mxu0 %v446
      %466 = vmatmul.f32.gmra.mxu0 %v444
      %v467 = vpop.f32.mrf.mxu0
      %v468 = vadd.f32 0.0, %v467
      %469 = vdwg.mxu0
      %470 = vmatpush.msra.mxu0 0.0
      %471 = vmatpush.msra.mxu0 0.0
      %472 = vmatpush.msra.mxu0 0.0
      %473 = vmatpush.msra.mxu0 0.0
      %474 = vmatpush.msra.mxu0 0.0
      %475 = vmatpush.msra.mxu0 0.0
      %476 = vmatpush.msra.mxu0 0.0
      %477 = vmatpush.msra.mxu0 0.0
      %478 = vmatpush.msra.mxu0 0.0
      %479 = vmatpush.msra.mxu0 0.0
      %480 = vmatpush.msra.mxu0 0.0
      %481 = vmatpush.msra.mxu0 0.0
      %482 = vmatpush.msra.mxu0 0.0
      %483 = vmatpush.msra.mxu0 0.0
      %484 = vmatpush.msra.mxu0 0.0
      %485 = vmatpush.msra.mxu0 %v448
      %486 = vmatmul.f32.gmra.mxu0 %v444
      %v487 = vpop.f32.mrf.mxu0
      %v488 = vadd.f32 0.0, %v487
      %489 = vdwg.mxu0
      %v490 = vadd.f32 %v431, %v468
      %v491 = vadd.f32 %v432, %v488
      %v492 = vld [vmem:[%s3] sm:$0xff]
      %494 = vset.pattern.permute.xlu0 0
      %495 = vperm.xlu0 %494, %v492
      %v496 = vpop.permute.xlu0 %495
      %v498 = vadd.f32 %v490, %v496
      %v499 = vadd.f32 %v491, %v496
      %v500 = vmax.f32 %v498, 0.0
      %v501 = vmax.f32 %v499, 0.0
      %502 = vst [vmem:[%s257] sm:$0xff] %v500
      %503 = vst [vmem:[%s257 + $0x8] sm:$0xff] %v501
      %s504 = smul.u32 2, %s19
      %p505 = scmp.lt.s32.totalorder %s20, 1
      %s506 = scalar_select %p505, %s20, 1
      %p507 = scmp.lt.s32.totalorder %s504, 1
      %s508 = scalar_select %p507, %s504, 1
      %s509 = smul.addr %s506, 2
      %s510 = sadd.s32 %s508, %s509
      %s511 = smul.addr %s510, 8
      %s512 = scalar_lea.vmem %s4, %s511
      // Predicated region
      $region37: #{perturb_layer_apply.1} parent=35 // pred_check
        %p513 = pneg %p143
      $region38: #{perturb_layer_apply.1} parent=35 // pred_check_branch
        %515 = sbr.rel (%p513) target = $region40
      $region39: #{perturb_layer_apply.1} parent=35 // pred_region
        %s516 = smul.u32 2, %s19
      $region40: #{perturb_layer_apply.1} parent=35 // pred_fallthru
        _
    $region36: #{perturb_layer_apply.1} parent=5 // pred_fallthru
      _
    %p517 = scmp.le.s32.totalorder 2, %s10
    // Predicated region
    $region41: #{perturb_layer_apply.1} parent=5 // pred_check
      %p518 = pneg %p517
    $region42: #{perturb_layer_apply.1} parent=5 // pred_check_branch
      %520 = sbr.rel (%p518) target = $region44
    $region43: #{perturb_layer_apply.1} parent=5 // pred_region
      %s521 = ssub.s32 %s10, 2
      // Predicated region
      $region45: #{perturb_layer_apply.1} parent=43 // pred_check
        %p522 = pneg %p149
      $region46: #{perturb_layer_apply.1} parent=43 // pred_check_branch
        %524 = sbr.rel (%p522) target = $region48
      $region47: #{perturb_layer_apply.1} parent=43 // pred_region
        %s525 = smul.u32 2, %s21
        %p526 = scmp.lt.s32.totalorder %s22, 1
        %s527 = scalar_select %p526, %s22, 1
        %p528 = scmp.lt.s32.totalorder %s525, 1
        %s529 = scalar_select %p528, %s525, 1
        %s530 = smul.addr %s527, 2
        %s531 = sadd.s32 %s529, %s530
        %s532 = smul.addr %s531, 8
        %s533 = scalar_lea.vmem %s4, %s532
      $region48: #{perturb_layer_apply.1} parent=43 // pred_fallthru
        _
    $region44: #{perturb_layer_apply.1} parent=5 // pred_fallthru
      _
  $region6: #{perturb_layer_apply.1} parent=0 // loop_footer
    %s14 = sadd.s32 1, %s10
  $region7: #{perturb_layer_apply.1} parent=0 // loop_footer_branch
    %9 = sbr.rel target = $region3
  $region8: #{perturb_layer_apply.1} parent=0 // loop_exit
    _

</llo_original>
